<compile_context>
chip_gen: v5e
topology: v5e:2x2
jax: 0.10.0
libtpu: 0.0.40
codegen_flags: <defaults>
</compile_context>

<pallas_src>
import functools

import jax
import jax.numpy as jnp
from jax.experimental import pallas as pl
from jax.experimental.pallas import tpu as pltpu


# ----------------------------------------------------------------------------
# Kernels
# ----------------------------------------------------------------------------

def _se_fused_kernel(x_ref, w1t_ref, b1_ref, w2t_ref, b2_ref, o_ref):
    """Single-pass SE: one (BB, C, T) batch slab (full T) per grid step."""
    inv_t = 1.0 / x_ref.shape[-1]                              # static python float

    # Read #1 of the slab feeds the time-mean only.  (Avoid holding the whole
    # slab live across the matmul/sigmoid chain — at large BB it is the entire
    # vreg file; VMEM re-reads use vld slots which have plenty of slack here.)
    mean = jnp.sum(x_ref[...].astype(jnp.float32), axis=-1) * inv_t     # (BB, C)

    # Excite: Conv1d(k=1) on a length-1 sequence == matmul (batched over BB rows,
    # lane-wide results).  Tiny vs. the HBM traffic — leave the MXU shape alone.
    h = jnp.dot(mean, w1t_ref[...], preferred_element_type=jnp.float32) + b1_ref[...]
    h = jnp.maximum(h, 0.0)                                    # ReLU
    s = jnp.dot(h, w2t_ref[...], preferred_element_type=jnp.float32) + b2_ref[...]
    s = jax.nn.sigmoid(s).astype(o_ref.dtype)                  # (BB, C) gate

    # Read #2 of the slab feeds the store directly (lane-broadcast of the gate).
    o_ref[...] = x_ref[...] * s[:, :, None]                    # (BB, C, T)


def _se_gate_kernel(x_ref, w1t_ref, b1_ref, w2t_ref, b2_ref, gate_ref, acc_ref,
                    *, total_t):
    """Two-pass fallback, pass 1: squeeze (sum over T tiles) + excite -> gate."""
    t = pl.program_id(0)

    @pl.when(t == 0)
    def _():
        acc_ref[...] = jnp.zeros_like(acc_ref)

    # Accumulate the time-sum for this T tile (f32 accumulation).
    acc_ref[...] += jnp.sum(x_ref[...].astype(jnp.float32), axis=-1)    # (B, C)

    @pl.when(t == pl.num_programs(0) - 1)
    def _():
        mean = acc_ref[...] * (1.0 / total_t)                  # (B, C)
        h = jnp.dot(mean, w1t_ref[...], preferred_element_type=jnp.float32) + b1_ref[...]
        h = jnp.maximum(h, 0.0)
        s = jnp.dot(h, w2t_ref[...], preferred_element_type=jnp.float32) + b2_ref[...]
        gate_ref[...] = jax.nn.sigmoid(s).astype(gate_ref.dtype)


def _se_scale_kernel(x_ref, gate_ref, o_ref):
    """Two-pass fallback, pass 2: T-parallel rescale out = x * gate."""
    o_ref[...] = (x_ref[...] * gate_ref[...][:, :, None]).astype(o_ref.dtype)


# ----------------------------------------------------------------------------
# Wrapper / sizing helpers
# ----------------------------------------------------------------------------

def _tpu_vmem_capacity_bytes():
    """Physical VMEM capacity; conservative (v7x-like) default if unavailable."""
    try:
        info = pltpu.get_tpu_info()
        cap = getattr(info, "vmem_capacity_bytes", None)
        if cap:
            return int(cap)
    except Exception:
        pass
    return 64 << 20


def _pick_time_block(T, max_elems):
    """Largest multiple-of-128 divisor of T that is <= max_elems, else T.

    Multiple-of-128 keeps output stores lane-dense (unmasked vst); an exact
    divisor keeps the T reduction free of padded partial blocks.
    """
    if T % 128 != 0:
        return T
    tt = (min(T, max(128, max_elems)) // 128) * 128
    while tt >= 128:
        if T % tt == 0:
            return tt
        tt -= 128
    return T


def se_module(x, w1, b1, w2, b2, *, force_two_pass=False, max_slab_bytes=None):
    """x: (B, C, T); w1: (Bn, C); b1: (Bn,); w2: (C, Bn); b2: (C,)."""
    B, C, T = x.shape
    Bn = w1.shape[0]
    itemsize = jnp.dtype(x.dtype).itemsize

    vmem_cap = _tpu_vmem_capacity_bytes()
    big_vmem = vmem_cap >= (96 << 20)       # v5e / v6e: 128 MiB physical VMEM
    multicore = not big_vmem                # v7x-like: 2 TensorCores, 64 MiB VMEM

    if max_slab_bytes is None:
        # v5e/v6e: large slabs / few grid steps push the HBM-bound copy toward
        # the roofline plateau.  v7x: keep 4x double-buffered in+out footprint
        # well under the 32 MiB scoped / 64 MiB physical VMEM.
        max_slab_bytes = (14 << 20) if big_vmem else (6 << 20)

    per_batch_bytes = C * T * itemsize

    # Route to the two-pass (T-tiled) form when a single batch slab is too big
    # for the fused kernel, or when a multicore chip would otherwise see a
    # 1-step grid (B == 1) and a T-parallel rescale can feed both TensorCores.
    use_two_pass = (
        force_two_pass
        or per_batch_bytes > max_slab_bytes
        or (multicore and B == 1 and T % 256 == 0 and per_batch_bytes > (2 << 20))
    )

    # Pre-orient parameters once (layout plumbing, not compute): transposed
    # weights for row-major (rows, C) @ (C, Bn) matmuls, biases as lane rows,
    # everything in f32 so accumulation stays f32 even with bf16 activations.
    w1t = jnp.transpose(w1).astype(jnp.float32)     # (C, Bn)
    w2t = jnp.transpose(w2).astype(jnp.float32)     # (Bn, C)
    b1r = jnp.reshape(b1, (1, Bn)).astype(jnp.float32)
    b2r = jnp.reshape(b2, (1, C)).astype(jnp.float32)
    param_bytes = (C * Bn + Bn + Bn * C + C) * 4

    if not use_two_pass:
        # ------------------------ fused single-pass -------------------------
        BB = max(1, min(B, max_slab_bytes // max(per_batch_bytes, 1)))
        if multicore and BB >= B and B >= 2:
            # v7x only: keep >= 2 grid steps so both TensorCores get work.
            BB = pl.cdiv(B, 2)
        grid_b = pl.cdiv(B, BB)

        slab = BB * C * T * itemsize
        vmem_limit = 2 * 2 * slab + 2 * param_bytes + (4 << 20)
        vmem_limit = int(min(max(vmem_limit, 16 << 20), int(vmem_cap * 0.9)))

        return pl.pallas_call(
            _se_fused_kernel,
            out_shape=jax.ShapeDtypeStruct((B, C, T), x.dtype),
            grid_spec=pltpu.PrefetchScalarGridSpec(
                num_scalar_prefetch=0,
                grid=(grid_b,),
                in_specs=[
                    # (BB, C, T): C and T blocks equal the full dims, so the
                    # (8,128) divisibility rule holds for any C, T.
                    pl.BlockSpec((BB, C, T), lambda b: (b, 0, 0)),
                    pl.BlockSpec((C, Bn), lambda b: (0, 0)),
                    pl.BlockSpec((1, Bn), lambda b: (0, 0)),
                    pl.BlockSpec((Bn, C), lambda b: (0, 0)),
                    pl.BlockSpec((1, C), lambda b: (0, 0)),
                ],
                out_specs=pl.BlockSpec((BB, C, T), lambda b: (b, 0, 0)),
            ),
            compiler_params=pltpu.CompilerParams(
                dimension_semantics=("parallel",),
                vmem_limit_bytes=vmem_limit,
            ),
        )(x, w1t, b1r, w2t, b2r)

    # -------------------- two-pass (T-tiled) fallback ------------------------
    # Pass 1: squeeze over T tiles (accumulator) + excite -> gate (B, C) in f32.
    # Pass 2: T-parallel rescale out = x * gate (both v7x TCs get work).
    tt = _pick_time_block(T, max_slab_bytes // max(B * C * itemsize, 1))
    grid_t = pl.cdiv(T, tt)
    slab = B * C * tt * itemsize
    gate_bytes = B * C * 4

    vmem1 = 2 * slab + 2 * gate_bytes + 2 * param_bytes + (4 << 20)
    vmem1 = int(min(max(vmem1, 16 << 20), int(vmem_cap * 0.9)))

    gate = pl.pallas_call(
        functools.partial(_se_gate_kernel, total_t=T),
        out_shape=jax.ShapeDtypeStruct((B, C), jnp.float32),
        grid_spec=pltpu.PrefetchScalarGridSpec(
            num_scalar_prefetch=0,
            grid=(grid_t,),
            in_specs=[
                pl.BlockSpec((B, C, tt), lambda t: (0, 0, t)),
                pl.BlockSpec((C, Bn), lambda t: (0, 0)),
                pl.BlockSpec((1, Bn), lambda t: (0, 0)),
                pl.BlockSpec((Bn, C), lambda t: (0, 0)),
                pl.BlockSpec((1, C), lambda t: (0, 0)),
            ],
            out_specs=pl.BlockSpec((B, C), lambda t: (0, 0)),
            scratch_shapes=[pltpu.VMEM((B, C), jnp.float32)],
        ),
        compiler_params=pltpu.CompilerParams(
            dimension_semantics=("arbitrary",),     # T is the reduction axis
            vmem_limit_bytes=vmem1,
        ),
    )(x, w1t, b1r, w2t, b2r)

    vmem2 = 2 * 2 * slab + 2 * gate_bytes + (4 << 20)
    vmem2 = int(min(max(vmem2, 16 << 20), int(vmem_cap * 0.9)))

    return pl.pallas_call(
        _se_scale_kernel,
        out_shape=jax.ShapeDtypeStruct((B, C, T), x.dtype),
        grid_spec=pltpu.PrefetchScalarGridSpec(
            num_scalar_prefetch=0,
            grid=(grid_t,),
            in_specs=[
                pl.BlockSpec((B, C, tt), lambda t: (0, 0, t)),
                pl.BlockSpec((B, C), lambda t: (0, 0)),
            ],
            out_specs=pl.BlockSpec((B, C, tt), lambda t: (0, 0, t)),
        ),
        compiler_params=pltpu.CompilerParams(
            dimension_semantics=("parallel",),      # T-parallel rescale
            vmem_limit_bytes=vmem2,
        ),
    )(x, gate)


def se_module_ref(x, w1, b1, w2, b2):
    """Pure-JAX reference mirroring the PyTorch forward."""
    mean = jnp.mean(x, axis=-1, keepdims=True)                       # (B, C, 1)
    h = jnp.einsum("oc,bci->boi", w1, mean) + b1[None, :, None]      # (B, Bn, 1)
    h = jnp.maximum(h, 0.0)
    s = jnp.einsum("co,boi->bci", w2, h) + b2[None, :, None]         # (B, C, 1)
    s = jax.nn.sigmoid(s)
    return x * s


if __name__ == "__main__":
    # Small shapes consistent with the module: (batch, channels, seq_len).
    # T is a multiple of 128 so output stores are unmasked (lane-dense).
    B, C, T = 8, 64, 256
    BOTTLENECK = 32

    key = jax.random.PRNGKey(0)
    kx, k1, k2, k3, k4 = jax.random.split(key, 5)

    x = jax.random.normal(kx, (B, C, T), dtype=jnp.float32)
    w1 = jax.random.normal(k1, (BOTTLENECK, C), dtype=jnp.float32) * (1.0 / jnp.sqrt(C))
    b1 = jax.random.normal(k2, (BOTTLENECK,), dtype=jnp.float32) * 0.1
    w2 = jax.random.normal(k3, (C, BOTTLENECK), dtype=jnp.float32) * (1.0 / jnp.sqrt(BOTTLENECK))
    b2 = jax.random.normal(k4, (C,), dtype=jnp.float32) * 0.1

    ref = se_module_ref(x, w1, b1, w2, b2)

    # Auto-routed path (fused single-pass kernel for these shapes).
    out = jax.block_until_ready(se_module(x, w1, b1, w2, b2))
    assert out.shape == x.shape and out.dtype == x.dtype
    assert jnp.allclose(out, ref, atol=1e-5, rtol=1e-5), "fused kernel mismatch"

    # Also exercise the two-pass (T-tiled) fallback used for large C*T / v7x B==1:
    # small slab cap forces TT=128 -> 2 T-blocks -> reduction accumulation is tested.
    out2 = jax.block_until_ready(
        se_module(x, w1, b1, w2, b2, force_two_pass=True, max_slab_bytes=256 * 1024))
    assert jnp.allclose(out2, ref, atol=1e-5, rtol=1e-5), "two-pass kernel mismatch"

    print("KERNEL_OK")
</pallas_src>

<mosaic_0001>
module attributes {stable_mosaic.version = 11 : i64} {
  func.func @_se_fused_kernel(%arg0: i32, %arg1: memref<4x64x256xf32, #tpu.memory_space<vmem>>, %arg2: memref<64x32xf32, #tpu.memory_space<vmem>>, %arg3: memref<1x32xf32, #tpu.memory_space<vmem>>, %arg4: memref<32x64xf32, #tpu.memory_space<vmem>>, %arg5: memref<1x64xf32, #tpu.memory_space<vmem>>, %arg6: memref<4x64x256xf32, #tpu.memory_space<vmem>>) attributes {dimension_semantics = [#tpu.dimension_semantics<parallel>], iteration_bounds = array<i64: 2>, scalar_prefetch = 0 : i64, scratch_operands = 0 : i64, tpu.core_type = #tpu.core_type<tc>, window_params = [{transform_indices = @transform_0, window_bounds = array<i64: 4, 64, 256>}, {pipeline_mode = #tpu.pipeline_mode<synchronous>, transform_indices = @transform_1, window_bounds = array<i64: 64, 32>}, {pipeline_mode = #tpu.pipeline_mode<synchronous>, transform_indices = @transform_2, window_bounds = array<i64: 1, 32>}, {pipeline_mode = #tpu.pipeline_mode<synchronous>, transform_indices = @transform_3, window_bounds = array<i64: 32, 64>}, {pipeline_mode = #tpu.pipeline_mode<synchronous>, transform_indices = @transform_4, window_bounds = array<i64: 1, 64>}, {transform_indices = @transform_5, window_bounds = array<i64: 4, 64, 256>}]} {
    %c0 = arith.constant 0 : index
    %c0_0 = arith.constant 0 : index
    %c0_1 = arith.constant 0 : index
    %0 = vector.load %arg1[%c0, %c0_0, %c0_1] : memref<4x64x256xf32, #tpu.memory_space<vmem>>, vector<4x64x256xf32>
    %cst = arith.constant dense<0.000000e+00> : vector<4x64xf32>
    %1 = vector.multi_reduction <add>, %0, %cst [2] : vector<4x64x256xf32> to vector<4x64xf32>
    %cst_2 = arith.constant 3.906250e-03 : f32
    %2 = vector.broadcast %cst_2 : f32 to vector<4x64xf32>
    %3 = arith.mulf %1, %2 : vector<4x64xf32>
    %c0_3 = arith.constant 0 : index
    %c0_4 = arith.constant 0 : index
    %4 = vector.load %arg2[%c0_3, %c0_4] : memref<64x32xf32, #tpu.memory_space<vmem>>, vector<64x32xf32>
    %cst_5 = arith.constant dense<0.000000e+00> : vector<4x32xf32>
    %5 = tpu.matmul %3, %4, %cst_5 {dimension_numbers = #tpu.dot_dimension_numbers<[1], [0], [0], [1], [0, 0, 1, 1], [], []>} : vector<4x64xf32>, vector<64x32xf32>, vector<4x32xf32> -> vector<4x32xf32>
    %c0_6 = arith.constant 0 : index
    %c0_7 = arith.constant 0 : index
    %6 = vector.load %arg3[%c0_6, %c0_7] : memref<1x32xf32, #tpu.memory_space<vmem>>, vector<1x32xf32>
    %7 = vector.broadcast %6 : vector<1x32xf32> to vector<4x32xf32>
    %8 = arith.addf %5, %7 : vector<4x32xf32>
    %cst_8 = arith.constant 0.000000e+00 : f32
    %9 = vector.broadcast %cst_8 : f32 to vector<4x32xf32>
    %10 = arith.maximumf %8, %9 : vector<4x32xf32>
    %c0_9 = arith.constant 0 : index
    %c0_10 = arith.constant 0 : index
    %11 = vector.load %arg4[%c0_9, %c0_10] : memref<32x64xf32, #tpu.memory_space<vmem>>, vector<32x64xf32>
    %cst_11 = arith.constant dense<0.000000e+00> : vector<4x64xf32>
    %12 = tpu.matmul %10, %11, %cst_11 {dimension_numbers = #tpu.dot_dimension_numbers<[1], [0], [0], [1], [0, 0, 1, 1], [], []>} : vector<4x32xf32>, vector<32x64xf32>, vector<4x64xf32> -> vector<4x64xf32>
    %c0_12 = arith.constant 0 : index
    %c0_13 = arith.constant 0 : index
    %13 = vector.load %arg5[%c0_12, %c0_13] : memref<1x64xf32, #tpu.memory_space<vmem>>, vector<1x64xf32>
    %14 = vector.broadcast %13 : vector<1x64xf32> to vector<4x64xf32>
    %15 = arith.addf %12, %14 : vector<4x64xf32>
    %16 = arith.negf %15 : vector<4x64xf32>
    %17 = math.exp %16 : vector<4x64xf32>
    %cst_14 = arith.constant 1.000000e+00 : f32
    %18 = vector.broadcast %cst_14 : f32 to vector<4x64xf32>
    %19 = arith.addf %18, %17 : vector<4x64xf32>
    %20 = arith.divf %18, %19 : vector<4x64xf32>
    %c0_15 = arith.constant 0 : index
    %c0_16 = arith.constant 0 : index
    %c0_17 = arith.constant 0 : index
    %21 = vector.load %arg1[%c0_15, %c0_16, %c0_17] : memref<4x64x256xf32, #tpu.memory_space<vmem>>, vector<4x64x256xf32>
    %22 = vector.shape_cast %20 : vector<4x64xf32> to vector<4x64x1xf32>
    %23 = vector.broadcast %22 : vector<4x64x1xf32> to vector<4x64x256xf32>
    %24 = arith.mulf %21, %23 : vector<4x64x256xf32>
    %c0_18 = arith.constant 0 : index
    %c0_19 = arith.constant 0 : index
    %c0_20 = arith.constant 0 : index
    %25 = vector.load %arg6[%c0_18, %c0_19, %c0_20] : memref<4x64x256xf32, #tpu.memory_space<vmem>>, vector<4x64x256xf32>
    tpu.vector_store %arg6[%c0_18, %c0_19, %c0_20], %24 {strides = array<i32>} : memref<4x64x256xf32, #tpu.memory_space<vmem>>, vector<4x64x256xf32>,
    return
  }
  func.func @transform_0(%arg0: i32) -> (i32, i32, i32) {
    %c0_i32 = arith.constant 0 : i32
    %c0_i32_0 = arith.constant 0 : i32
    %c0_i32_1 = arith.constant 0 : i32
    return %arg0, %c0_i32, %c0_i32_0 : i32, i32, i32
  }
  func.func @transform_1(%arg0: i32) -> (i32, i32) {
    %c0_i32 = arith.constant 0 : i32
    %c0_i32_0 = arith.constant 0 : i32
    %c0_i32_1 = arith.constant 0 : i32
    return %c0_i32, %c0_i32_0 : i32, i32
  }
  func.func @transform_2(%arg0: i32) -> (i32, i32) {
    %c0_i32 = arith.constant 0 : i32
    %c0_i32_0 = arith.constant 0 : i32
    %c0_i32_1 = arith.constant 0 : i32
    return %c0_i32, %c0_i32_0 : i32, i32
  }
  func.func @transform_3(%arg0: i32) -> (i32, i32) {
    %c0_i32 = arith.constant 0 : i32
    %c0_i32_0 = arith.constant 0 : i32
    %c0_i32_1 = arith.constant 0 : i32
    return %c0_i32, %c0_i32_0 : i32, i32
  }
  func.func @transform_4(%arg0: i32) -> (i32, i32) {
    %c0_i32 = arith.constant 0 : i32
    %c0_i32_0 = arith.constant 0 : i32
    %c0_i32_1 = arith.constant 0 : i32
    return %c0_i32, %c0_i32_0 : i32, i32
  }
  func.func @transform_5(%arg0: i32) -> (i32, i32, i32) {
    %c0_i32 = arith.constant 0 : i32
    %c0_i32_0 = arith.constant 0 : i32
    %c0_i32_1 = arith.constant 0 : i32
    return %arg0, %c0_i32, %c0_i32_0 : i32, i32, i32
  }
}

</mosaic_0001>

<llo_original>
// kernel: tpu_custom_call.1
$region0: #{tpu_custom_call.1}
  #allocation0 [shape = 'u32[]', space=smem, size = 0x4, offset = 0x4, fixed_abs, tag = 'smem constant byte address 0x4 - core index']
  #allocation1 [shape = 'u32[72,128]{1,0:T(1,128)}', space=vmem, size = 0x9000, scoped, tag = 'internal scratch']
  %s0 = inlined_call_operand.hbm [shape: f32[8,64,256], index: 0, kind: input, shape index: {}]
  %s1 = inlined_call_operand.vmem [shape: f32[64,32], index: 1, kind: input, shape index: {}]
  %s2 = inlined_call_operand.vmem [shape: f32[1,32], index: 2, kind: input, shape index: {}]
  %s3 = inlined_call_operand.vmem [shape: f32[32,64], index: 3, kind: input, shape index: {}]
  %s4 = inlined_call_operand.vmem [shape: f32[1,64], index: 4, kind: input, shape index: {}]
  %s5 = inlined_call_operand.hbm [shape: f32[8,64,256], index: 5, kind: output, shape index: {}]
  %s6 = sld [smem:[#allocation0]]
  $region57: #{tpu_custom_call.1} parent=0
    _
  %s8 = ssub.s32 1, %s6
  %s9 = scalar_select 0, %s8, %s6
  $region1: #{tpu_custom_call.1} parent=0
    #allocation2 [shape = 'u8[524288]{0}', space=vmem, size = 0x80000, scoped, tag = 'input window, operand 0']
    #allocation3 [shape = 's32[2]{0}', space=sflag, size = 0x8, scoped, tag = 'scoped memory for tpu_custom_call.1']
    #allocation4 [shape = 's32[2]{0}', space=sflag, size = 0x8, scoped, tag = 'scoped memory for tpu_custom_call.1']
    #allocation5 [shape = 'u8[524288]{0}', space=vmem, size = 0x80000, scoped, tag = 'output window, operand 0']
    %10 = vsyncpa [#allocation3], 0
    %s11 = scalar_lea.sflag [#allocation3], 1
    %12 = vsyncpa %s11, 0
    %13 = vsyncpa [#allocation4], 0
    %s14 = scalar_lea.sflag [#allocation4], 1
    %15 = vsyncpa %s14, 0
    loop: start=0, step=1, limit=4
    $region2: #{tpu_custom_call.1} parent=1 // loop_pre_header
      _
    $region3: #{tpu_custom_call.1} parent=1 // loop_header
      %s17 = sphi 0, %s21
      %p18 = scmp.ge.s32.totalorder %s17, 4
      %s27 = sphi 0, %s29
      %s30 = sphi 0, %s27
      %s31 = sphi 0, %s30
      %s47 = sphi 0, %s31
      %s51 = sphi 0, %s51
      %s53 = sphi 0, %s51
      %s54 = sphi 0, %s53
      %s68 = sphi 0, %s54
      %s72 = sphi 0, %s72
      %s74 = sphi 0, %s72
      %s75 = sphi 0, %s74
      %s89 = sphi 0, %s75
      %s93 = sphi 0, %s93
      %s95 = sphi 0, %s93
      %s96 = sphi 0, %s95
      %s110 = sphi 0, %s96
      %s114 = sphi 0, %s114
      %s116 = sphi 0, %s114
      %s117 = sphi 0, %s116
      %s131 = sphi 0, %s117
      %s137 = sphi 0, %s139
      %s140 = sphi 0, %s137
      %s141 = sphi 0, %s140
      %s157 = sphi 0, %s141
    $region4: #{tpu_custom_call.1} parent=1 // loop_header_branch
      %20 = sbr.rel (%p18) target = $region8
    $region5: #{tpu_custom_call.1} parent=1 // loop_body
      %s22 = ssub.s32 %s17, 1
      %s23 = ssub.s32 %s17, 2
      %s24 = sadd.s32 %s17, 1
      %s25 = ssub.s32 %s17, %s24
      %p26 = scmp.eq.s32.totalorder %s25, 0
      %s28 = sadd.s32 %s27, 1
      %s29 = scalar_select %p26, %s27, %s28
      %p32 = pneg %p26
      %p33 = scmp.eq.s32.totalorder %s17, 1
      %p34 = por %p32, %p33
      %p35 = scmp.ne.s32.totalorder %s27, %s30
      %p36 = scmp.eq.s32.totalorder %s17, 0
      %p37 = por %p35, %p36
      %p38 = scmp.ne.s32.totalorder %s27, %s30
      %p39 = scmp.eq.s32.totalorder %s22, 1
      %p40 = por %p38, %p39
      %p41 = scmp.ne.s32.totalorder %s30, %s31
      %p42 = scmp.eq.s32.totalorder %s22, 0
      %p43 = por %p41, %p42
      %p44 = scmp.ne.s32.totalorder %s30, %s31
      %p45 = scmp.eq.s32.totalorder %s23, 1
      %p46 = por %p44, %p45
      %p48 = scmp.ne.s32.totalorder %s31, %s47
      %p49 = scmp.eq.s32.totalorder %s23, 0
      %p50 = por %p48, %p49
      %s52 = sadd.s32 %s51, 1
      %p55 = scmp.eq.s32.totalorder %s17, 1
      %p56 = scmp.ne.s32.totalorder %s51, %s53
      %p57 = scmp.eq.s32.totalorder %s17, 0
      %p58 = por %p56, %p57
      %p59 = scmp.ne.s32.totalorder %s51, %s53
      %p60 = scmp.eq.s32.totalorder %s22, 1
      %p61 = por %p59, %p60
      %p62 = scmp.ne.s32.totalorder %s53, %s54
      %p63 = scmp.eq.s32.totalorder %s22, 0
      %p64 = por %p62, %p63
      %p65 = scmp.ne.s32.totalorder %s53, %s54
      %p66 = scmp.eq.s32.totalorder %s23, 1
      %p67 = por %p65, %p66
      %p69 = scmp.ne.s32.totalorder %s54, %s68
      %p70 = scmp.eq.s32.totalorder %s23, 0
      %p71 = por %p69, %p70
      %s73 = sadd.s32 %s72, 1
      %p76 = scmp.eq.s32.totalorder %s17, 1
      %p77 = scmp.ne.s32.totalorder %s72, %s74
      %p78 = scmp.eq.s32.totalorder %s17, 0
      %p79 = por %p77, %p78
      %p80 = scmp.ne.s32.totalorder %s72, %s74
      %p81 = scmp.eq.s32.totalorder %s22, 1
      %p82 = por %p80, %p81
      %p83 = scmp.ne.s32.totalorder %s74, %s75
      %p84 = scmp.eq.s32.totalorder %s22, 0
      %p85 = por %p83, %p84
      %p86 = scmp.ne.s32.totalorder %s74, %s75
      %p87 = scmp.eq.s32.totalorder %s23, 1
      %p88 = por %p86, %p87
      %p90 = scmp.ne.s32.totalorder %s75, %s89
      %p91 = scmp.eq.s32.totalorder %s23, 0
      %p92 = por %p90, %p91
      %s94 = sadd.s32 %s93, 1
      %p97 = scmp.eq.s32.totalorder %s17, 1
      %p98 = scmp.ne.s32.totalorder %s93, %s95
      %p99 = scmp.eq.s32.totalorder %s17, 0
      %p100 = por %p98, %p99
      %p101 = scmp.ne.s32.totalorder %s93, %s95
      %p102 = scmp.eq.s32.totalorder %s22, 1
      %p103 = por %p101, %p102
      %p104 = scmp.ne.s32.totalorder %s95, %s96
      %p105 = scmp.eq.s32.totalorder %s22, 0
      %p106 = por %p104, %p105
      %p107 = scmp.ne.s32.totalorder %s95, %s96
      %p108 = scmp.eq.s32.totalorder %s23, 1
      %p109 = por %p107, %p108
      %p111 = scmp.ne.s32.totalorder %s96, %s110
      %p112 = scmp.eq.s32.totalorder %s23, 0
      %p113 = por %p111, %p112
      %s115 = sadd.s32 %s114, 1
      %p118 = scmp.eq.s32.totalorder %s17, 1
      %p119 = scmp.ne.s32.totalorder %s114, %s116
      %p120 = scmp.eq.s32.totalorder %s17, 0
      %p121 = por %p119, %p120
      %p122 = scmp.ne.s32.totalorder %s114, %s116
      %p123 = scmp.eq.s32.totalorder %s22, 1
      %p124 = por %p122, %p123
      %p125 = scmp.ne.s32.totalorder %s116, %s117
      %p126 = scmp.eq.s32.totalorder %s22, 0
      %p127 = por %p125, %p126
      %p128 = scmp.ne.s32.totalorder %s116, %s117
      %p129 = scmp.eq.s32.totalorder %s23, 1
      %p130 = por %p128, %p129
      %p132 = scmp.ne.s32.totalorder %s117, %s131
      %p133 = scmp.eq.s32.totalorder %s23, 0
      %p134 = por %p132, %p133
      %s135 = ssub.s32 %s17, %s24
      %p136 = scmp.eq.s32.totalorder %s135, 0
      %s138 = sadd.s32 %s137, 1
      %s139 = scalar_select %p136, %s137, %s138
      %p142 = pneg %p136
      %p143 = scmp.eq.s32.totalorder %s17, 1
      %p144 = por %p142, %p143
      %p145 = scmp.ne.s32.totalorder %s137, %s140
      %p146 = scmp.eq.s32.totalorder %s17, 0
      %p147 = por %p145, %p146
      %p148 = scmp.ne.s32.totalorder %s137, %s140
      %p149 = scmp.eq.s32.totalorder %s22, 1
      %p150 = por %p148, %p149
      %p151 = scmp.ne.s32.totalorder %s140, %s141
      %p152 = scmp.eq.s32.totalorder %s22, 0
      %p153 = por %p151, %p152
      %p154 = scmp.ne.s32.totalorder %s140, %s141
      %p155 = scmp.eq.s32.totalorder %s23, 1
      %p156 = por %p154, %p155
      %p158 = scmp.ne.s32.totalorder %s141, %s157
      %p159 = scmp.eq.s32.totalorder %s23, 0
      %p160 = por %p158, %p159
      %p161 = scmp.le.s32.totalorder 1, %s17
      %p162 = scmp.lt.s32.totalorder %s17, 3
      %p163 = pnand %p161, %p162
      %p164 = pneg %p163
      // Predicated region
      $region9: #{tpu_custom_call.1} parent=5 // pred_check
        _
      $region10: #{tpu_custom_call.1} parent=5 // pred_check_branch
        %166 = sbr.rel (%p163) target = $region12
      $region11: #{tpu_custom_call.1} parent=5 // pred_region
        %s167 = ssub.s32 %s17, 1
        // Predicated region
        $region13: #{tpu_custom_call.1} parent=11 // pred_check
          %p168 = pneg %p64
        $region14: #{tpu_custom_call.1} parent=11 // pred_check_branch
          %170 = sbr.rel (%p168) target = $region16
        $region15: #{tpu_custom_call.1} parent=11 // pred_region
          _
        $region16: #{tpu_custom_call.1} parent=11 // pred_fallthru
          _
        // Predicated region
        $region17: #{tpu_custom_call.1} parent=11 // pred_check
          %p171 = pneg %p85
        $region18: #{tpu_custom_call.1} parent=11 // pred_check_branch
          %173 = sbr.rel (%p171) target = $region20
        $region19: #{tpu_custom_call.1} parent=11 // pred_region
          _
        $region20: #{tpu_custom_call.1} parent=11 // pred_fallthru
          _
        // Predicated region
        $region21: #{tpu_custom_call.1} parent=11 // pred_check
          %p174 = pneg %p106
        $region22: #{tpu_custom_call.1} parent=11 // pred_check_branch
          %176 = sbr.rel (%p174) target = $region24
        $region23: #{tpu_custom_call.1} parent=11 // pred_region
          _
        $region24: #{tpu_custom_call.1} parent=11 // pred_fallthru
          _
        // Predicated region
        $region25: #{tpu_custom_call.1} parent=11 // pred_check
          %p177 = pneg %p127
        $region26: #{tpu_custom_call.1} parent=11 // pred_check_branch
          %179 = sbr.rel (%p177) target = $region28
        $region27: #{tpu_custom_call.1} parent=11 // pred_region
          _
        $region28: #{tpu_custom_call.1} parent=11 // pred_fallthru
          _
      $region12: #{tpu_custom_call.1} parent=5 // pred_fallthru
        _
      %p180 = scmp.lt.s32.totalorder %s17, 2
      // Predicated region
      $region29: #{tpu_custom_call.1} parent=5 // pred_check
        %p181 = pneg %p180
      $region30: #{tpu_custom_call.1} parent=5 // pred_check_branch
        %183 = sbr.rel (%p181) target = $region32
      $region31: #{tpu_custom_call.1} parent=5 // pred_region
        // Predicated region
        $region33: #{tpu_custom_call.1} parent=31 // pred_check
          %p184 = pneg %p37
        $region34: #{tpu_custom_call.1} parent=31 // pred_check_branch
          %186 = sbr.rel (%p184) target = $region36
        $region35: #{tpu_custom_call.1} parent=31 // pred_region
          %s187 = sand.u32 %s27, 1
          %s188 = scalar_lea.sflag [#allocation3], %s187
          %s189 = sand.u32 %s27, 1
          %s190 = smul.addr %s189, 512
          %s191 = scalar_lea.vmem [#allocation2], %s190
          %s192 = smul.u32 4, %s17
          %194 = vsyncadd %s188, 0
          %s195 = smul.addr %s192, 16
          %s196 = smul.addr %s195, 8
          %s197 = scalar_lea.hbm %s0, %s196
          %s198 = sshll.u32 %s197, 4
          %s199 = int_to_ptr.hbm [resolvable:$true] %s198
          %s200 = sshll.u32 %s191, 4
          %s201 = int_to_ptr.vmem [resolvable:$true] %s200
          %206 = dma.hbm_to_vmem [thread:$0]  %s199, 8192, %s201, %s188, 256, 256, 16
        $region36: #{tpu_custom_call.1} parent=31 // pred_fallthru
          _
      $region32: #{tpu_custom_call.1} parent=5 // pred_fallthru
        _
      %p207 = scmp.le.s32.totalorder 1, %s17
      %p208 = scmp.lt.s32.totalorder %s17, 3
      %p209 = pnand %p207, %p208
      %p210 = pneg %p209
      // Predicated region
      $region37: #{tpu_custom_call.1} parent=5 // pred_check
        _
      $region38: #{tpu_custom_call.1} parent=5 // pred_check_branch
        %212 = sbr.rel (%p209) target = $region40
      $region39: #{tpu_custom_call.1} parent=5 // pred_region
        %s213 = ssub.s32 %s17, 1
        %s214 = sand.u32 %s30, 1
        %s215 = scalar_lea.sflag [#allocation3], %s214
        %s216 = sand.u32 %s30, 1
        %s217 = smul.addr %s216, 512
        %s218 = scalar_lea.vmem [#allocation2], %s217
        // Predicated region
        $region41: #{tpu_custom_call.1} parent=39 // pred_check
          %p219 = pneg %p43
        $region42: #{tpu_custom_call.1} parent=39 // pred_check_branch
          %221 = sbr.rel (%p219) target = $region44
        $region43: #{tpu_custom_call.1} parent=39 // pred_region
          %223 = dma.done %s215, 8192
        $region44: #{tpu_custom_call.1} parent=39 // pred_fallthru
          _
        %s224 = sand.u32 %s30, 1
        %s225 = scalar_lea.sflag [#allocation3], %s224
        %s226 = sand.u32 %s30, 1
        %s227 = smul.addr %s226, 512
        %s228 = scalar_lea.vmem [#allocation2], %s227
        %p229 = pneg %p43
        %p230 = pneg %p40
        %p231 = pneg %p64
        %p232 = pneg %p61
        %p233 = pneg %p85
        %p234 = pneg %p82
        %p235 = pneg %p106
        %p236 = pneg %p103
        %p237 = pneg %p127
        %p238 = pneg %p124
        %p239 = pneg %p153
        %p240 = pneg %p150
        %s241 = sand.u32 %s140, 1
        %s242 = scalar_lea.sflag [#allocation4], %s241
        %s243 = sand.u32 %s140, 1
        %s244 = smul.addr %s243, 512
        %s245 = scalar_lea.vmem [#allocation5], %s244
        %s246 = smul.u32 4, %s22
        %s247 = smul.u32 4, %s22
        %v248 = vld [vmem:[%s218] sm:$0xff]
        %v249 = vld [vmem:[%s218 + $0x8] sm:$0xff]
        %v250 = vld [vmem:[%s218 + $0x10] sm:$0xff]
        %v251 = vld [vmem:[%s218 + $0x18] sm:$0xff]
        %v252 = vld [vmem:[%s218 + $0x20] sm:$0xff]
        %v253 = vld [vmem:[%s218 + $0x28] sm:$0xff]
        %v254 = vld [vmem:[%s218 + $0x30] sm:$0xff]
        %v255 = vld [vmem:[%s218 + $0x38] sm:$0xff]
        %v256 = vld [vmem:[%s218 + $0x40] sm:$0xff]
        %v257 = vld [vmem:[%s218 + $0x48] sm:$0xff]
        %v258 = vld [vmem:[%s218 + $0x50] sm:$0xff]
        %v259 = vld [vmem:[%s218 + $0x58] sm:$0xff]
        %v260 = vld [vmem:[%s218 + $0x60] sm:$0xff]
        %v261 = vld [vmem:[%s218 + $0x68] sm:$0xff]
        %v262 = vld [vmem:[%s218 + $0x70] sm:$0xff]
        %v263 = vld [vmem:[%s218 + $0x78] sm:$0xff]
        %v264 = vld [vmem:[%s218 + $0x80] sm:$0xff]
        %v265 = vld [vmem:[%s218 + $0x88] sm:$0xff]
        %v266 = vld [vmem:[%s218 + $0x90] sm:$0xff]
        %v267 = vld [vmem:[%s218 + $0x98] sm:$0xff]
        %v268 = vld [vmem:[%s218 + $0xa0] sm:$0xff]
        %v269 = vld [vmem:[%s218 + $0xa8] sm:$0xff]
        %v270 = vld [vmem:[%s218 + $0xb0] sm:$0xff]
        %v271 = vld [vmem:[%s218 + $0xb8] sm:$0xff]
        %v272 = vld [vmem:[%s218 + $0xc0] sm:$0xff]
        %v273 = vld [vmem:[%s218 + $0xc8] sm:$0xff]
        %v274 = vld [vmem:[%s218 + $0xd0] sm:$0xff]
        %v275 = vld [vmem:[%s218 + $0xd8] sm:$0xff]
        %v276 = vld [vmem:[%s218 + $0xe0] sm:$0xff]
        %v277 = vld [vmem:[%s218 + $0xe8] sm:$0xff]
        %v278 = vld [vmem:[%s218 + $0xf0] sm:$0xff]
        %v279 = vld [vmem:[%s218 + $0xf8] sm:$0xff]
        %v280 = vld [vmem:[%s218 + $0x100] sm:$0xff]
        %v281 = vld [vmem:[%s218 + $0x108] sm:$0xff]
        %v282 = vld [vmem:[%s218 + $0x110] sm:$0xff]
        %v283 = vld [vmem:[%s218 + $0x118] sm:$0xff]
        %v284 = vld [vmem:[%s218 + $0x120] sm:$0xff]
        %v285 = vld [vmem:[%s218 + $0x128] sm:$0xff]
        %v286 = vld [vmem:[%s218 + $0x130] sm:$0xff]
        %v287 = vld [vmem:[%s218 + $0x138] sm:$0xff]
        %v288 = vld [vmem:[%s218 + $0x140] sm:$0xff]
        %v289 = vld [vmem:[%s218 + $0x148] sm:$0xff]
        %v290 = vld [vmem:[%s218 + $0x150] sm:$0xff]
        %v291 = vld [vmem:[%s218 + $0x158] sm:$0xff]
        %v292 = vld [vmem:[%s218 + $0x160] sm:$0xff]
        %v293 = vld [vmem:[%s218 + $0x168] sm:$0xff]
        %v294 = vld [vmem:[%s218 + $0x170] sm:$0xff]
        %v295 = vld [vmem:[%s218 + $0x178] sm:$0xff]
        %v296 = vld [vmem:[%s218 + $0x180] sm:$0xff]
        %v297 = vld [vmem:[%s218 + $0x188] sm:$0xff]
        %v298 = vld [vmem:[%s218 + $0x190] sm:$0xff]
        %v299 = vld [vmem:[%s218 + $0x198] sm:$0xff]
        %v300 = vld [vmem:[%s218 + $0x1a0] sm:$0xff]
        %v301 = vld [vmem:[%s218 + $0x1a8] sm:$0xff]
        %v302 = vld [vmem:[%s218 + $0x1b0] sm:$0xff]
        %v303 = vld [vmem:[%s218 + $0x1b8] sm:$0xff]
        %v304 = vld [vmem:[%s218 + $0x1c0] sm:$0xff]
        %v305 = vld [vmem:[%s218 + $0x1c8] sm:$0xff]
        %v306 = vld [vmem:[%s218 + $0x1d0] sm:$0xff]
        %v307 = vld [vmem:[%s218 + $0x1d8] sm:$0xff]
        %v308 = vld [vmem:[%s218 + $0x1e0] sm:$0xff]
        %v309 = vld [vmem:[%s218 + $0x1e8] sm:$0xff]
        %v310 = vld [vmem:[%s218 + $0x1f0] sm:$0xff]
        %v311 = vld [vmem:[%s218 + $0x1f8] sm:$0xff]
        %v312 = vadd.f32 %v248, %v249
        %313 = vadd.xlane.f32.xlu0 %v312
        %v314 = vpop.xlane.xlu0 %313
        %v315 = vadd.f32 %v250, %v251
        %316 = vadd.xlane.f32.xlu0 %v315
        %v317 = vpop.xlane.xlu0 %316
        %v318 = vadd.f32 %v252, %v253
        %319 = vadd.xlane.f32.xlu0 %v318
        %v320 = vpop.xlane.xlu0 %319
        %v321 = vadd.f32 %v254, %v255
        %322 = vadd.xlane.f32.xlu0 %v321
        %v323 = vpop.xlane.xlu0 %322
        %v324 = vadd.f32 %v256, %v257
        %325 = vadd.xlane.f32.xlu0 %v324
        %v326 = vpop.xlane.xlu0 %325
        %v327 = vadd.f32 %v258, %v259
        %328 = vadd.xlane.f32.xlu0 %v327
        %v329 = vpop.xlane.xlu0 %328
        %v330 = vadd.f32 %v260, %v261
        %331 = vadd.xlane.f32.xlu0 %v330
        %v332 = vpop.xlane.xlu0 %331
        %v333 = vadd.f32 %v262, %v263
        %334 = vadd.xlane.f32.xlu0 %v333
        %v335 = vpop.xlane.xlu0 %334
        %v336 = vadd.f32 %v264, %v265
        %337 = vadd.xlane.f32.xlu0 %v336
        %v338 = vpop.xlane.xlu0 %337
        %v339 = vadd.f32 %v266, %v267
        %340 = vadd.xlane.f32.xlu0 %v339
        %v341 = vpop.xlane.xlu0 %340
        %v342 = vadd.f32 %v268, %v269
        %343 = vadd.xlane.f32.xlu0 %v342
        %v344 = vpop.xlane.xlu0 %343
        %v345 = vadd.f32 %v270, %v271
        %346 = vadd.xlane.f32.xlu0 %v345
        %v347 = vpop.xlane.xlu0 %346
        %v348 = vadd.f32 %v272, %v273
        %349 = vadd.xlane.f32.xlu0 %v348
        %v350 = vpop.xlane.xlu0 %349
        %v351 = vadd.f32 %v274, %v275
        %352 = vadd.xlane.f32.xlu0 %v351
        %v353 = vpop.xlane.xlu0 %352
        %v354 = vadd.f32 %v276, %v277
        %355 = vadd.xlane.f32.xlu0 %v354
        %v356 = vpop.xlane.xlu0 %355
        %v357 = vadd.f32 %v278, %v279
        %358 = vadd.xlane.f32.xlu0 %v357
        %v359 = vpop.xlane.xlu0 %358
        %v360 = vadd.f32 %v280, %v281
        %361 = vadd.xlane.f32.xlu0 %v360
        %v362 = vpop.xlane.xlu0 %361
        %v363 = vadd.f32 %v282, %v283
        %364 = vadd.xlane.f32.xlu0 %v363
        %v365 = vpop.xlane.xlu0 %364
        %v366 = vadd.f32 %v284, %v285
        %367 = vadd.xlane.f32.xlu0 %v366
        %v368 = vpop.xlane.xlu0 %367
        %v369 = vadd.f32 %v286, %v287
        %370 = vadd.xlane.f32.xlu0 %v369
        %v371 = vpop.xlane.xlu0 %370
        %v372 = vadd.f32 %v288, %v289
        %373 = vadd.xlane.f32.xlu0 %v372
        %v374 = vpop.xlane.xlu0 %373
        %v375 = vadd.f32 %v290, %v291
        %376 = vadd.xlane.f32.xlu0 %v375
        %v377 = vpop.xlane.xlu0 %376
        %v378 = vadd.f32 %v292, %v293
        %379 = vadd.xlane.f32.xlu0 %v378
        %v380 = vpop.xlane.xlu0 %379
        %v381 = vadd.f32 %v294, %v295
        %382 = vadd.xlane.f32.xlu0 %v381
        %v383 = vpop.xlane.xlu0 %382
        %v384 = vadd.f32 %v296, %v297
        %385 = vadd.xlane.f32.xlu0 %v384
        %v386 = vpop.xlane.xlu0 %385
        %v387 = vadd.f32 %v298, %v299
        %388 = vadd.xlane.f32.xlu0 %v387
        %v389 = vpop.xlane.xlu0 %388
        %v390 = vadd.f32 %v300, %v301
        %391 = vadd.xlane.f32.xlu0 %v390
        %v392 = vpop.xlane.xlu0 %391
        %v393 = vadd.f32 %v302, %v303
        %394 = vadd.xlane.f32.xlu0 %v393
        %v395 = vpop.xlane.xlu0 %394
        %v396 = vadd.f32 %v304, %v305
        %397 = vadd.xlane.f32.xlu0 %v396
        %v398 = vpop.xlane.xlu0 %397
        %v399 = vadd.f32 %v306, %v307
        %400 = vadd.xlane.f32.xlu0 %v399
        %v401 = vpop.xlane.xlu0 %400
        %v402 = vadd.f32 %v308, %v309
        %403 = vadd.xlane.f32.xlu0 %v402
        %v404 = vpop.xlane.xlu0 %403
        %v405 = vadd.f32 %v310, %v311
        %406 = vadd.xlane.f32.xlu0 %v405
        %v407 = vpop.xlane.xlu0 %406
        %v408 = vmul.f32 %v314, 0.00390625
        %v409 = vmul.f32 %v317, 0.00390625
        %v410 = vmul.f32 %v320, 0.00390625
        %v411 = vmul.f32 %v323, 0.00390625
        %v412 = vmul.f32 %v326, 0.00390625
        %v413 = vmul.f32 %v329, 0.00390625
        %v414 = vmul.f32 %v332, 0.00390625
        %v415 = vmul.f32 %v335, 0.00390625
        %v416 = vmul.f32 %v338, 0.00390625
        %v417 = vmul.f32 %v341, 0.00390625
        %v418 = vmul.f32 %v344, 0.00390625
        %v419 = vmul.f32 %v347, 0.00390625
        %v420 = vmul.f32 %v350, 0.00390625
        %v421 = vmul.f32 %v353, 0.00390625
        %v422 = vmul.f32 %v356, 0.00390625
        %v423 = vmul.f32 %v359, 0.00390625
        %v424 = vmul.f32 %v362, 0.00390625
        %v425 = vmul.f32 %v365, 0.00390625
        %v426 = vmul.f32 %v368, 0.00390625
        %v427 = vmul.f32 %v371, 0.00390625
        %v428 = vmul.f32 %v374, 0.00390625
        %v429 = vmul.f32 %v377, 0.00390625
        %v430 = vmul.f32 %v380, 0.00390625
        %v431 = vmul.f32 %v383, 0.00390625
        %v432 = vmul.f32 %v386, 0.00390625
        %v433 = vmul.f32 %v389, 0.00390625
        %v434 = vmul.f32 %v392, 0.00390625
        %v435 = vmul.f32 %v395, 0.00390625
        %v436 = vmul.f32 %v398, 0.00390625
        %v437 = vmul.f32 %v401, 0.00390625
        %v438 = vmul.f32 %v404, 0.00390625
        %v439 = vmul.f32 %v407, 0.00390625
        %v440 = vld [vmem:[%s1] sm:$0xff]
        %v441 = vld [vmem:[%s1 + $0x8] sm:$0xff]
        %v442 = vld [vmem:[%s1 + $0x10] sm:$0xff]
        %v443 = vld [vmem:[%s1 + $0x18] sm:$0xff]
        %v444 = vld [vmem:[%s1 + $0x20] sm:$0xff]
        %v445 = vld [vmem:[%s1 + $0x28] sm:$0xff]
        %v446 = vld [vmem:[%s1 + $0x30] sm:$0xff]
        %v447 = vld [vmem:[%s1 + $0x38] sm:$0xff]
        %v448 = vld [vmem:[%s2] sm:$0x1]
        %v450 = vperm.slane %v448, 0
        %v484 = vlaneseq
        %v485 = vand.u32 %v484, 127
        %v486 = vperm.slane %v408, %v485
        %v487 = vadd.s32 %v485, 4294967288
        %v488 = vperm.slane %v409, %v487
        %vm489 = vcmask 130112
        %v490 = vsel %vm489, %v488, %v486
        %v491 = vadd.s32 %v485, 4294967280
        %v492 = vperm.slane %v410, %v491
        %vm493 = vcmask 195712
        %v494 = vsel %vm493, %v492, %v490
        %v495 = vadd.s32 %v485, 4294967272
        %v496 = vperm.slane %v411, %v495
        %vm497 = vcmask 261312
        %v498 = vsel %vm497, %v496, %v494
        %v499 = vadd.s32 %v485, 4294967264
        %v500 = vperm.slane %v412, %v499
        %vm501 = vcmask 326912
        %v502 = vsel %vm501, %v500, %v498
        %v503 = vadd.s32 %v485, 4294967256
        %v504 = vperm.slane %v413, %v503
        %vm505 = vcmask 392512
        %v506 = vsel %vm505, %v504, %v502
        %v507 = vadd.s32 %v485, 4294967248
        %v508 = vperm.slane %v414, %v507
        %vm509 = vcmask 458112
        %v510 = vsel %vm509, %v508, %v506
        %v511 = vadd.s32 %v485, 4294967240
        %v512 = vperm.slane %v415, %v511
        %vm513 = vcmask 523712
        %v514 = vsel %vm513, %v512, %v510
        %v515 = vperm.slane %v416, %v485
        %v516 = vperm.slane %v417, %v487
        %v517 = vsel %vm489, %v516, %v515
        %v518 = vperm.slane %v418, %v491
        %v519 = vsel %vm493, %v518, %v517
        %v520 = vperm.slane %v419, %v495
        %v521 = vsel %vm497, %v520, %v519
        %v522 = vperm.slane %v420, %v499
        %v523 = vsel %vm501, %v522, %v521
        %v524 = vperm.slane %v421, %v503
        %v525 = vsel %vm505, %v524, %v523
        %v526 = vperm.slane %v422, %v507
        %v527 = vsel %vm509, %v526, %v525
        %v528 = vperm.slane %v423, %v511
        %v529 = vsel %vm513, %v528, %v527
        %v530 = vperm.slane %v424, %v485
        %v531 = vperm.slane %v425, %v487
        %v532 = vsel %vm489, %v531, %v530
        %v533 = vperm.slane %v426, %v491
        %v534 = vsel %vm493, %v533, %v532
        %v535 = vperm.slane %v427, %v495
        %v536 = vsel %vm497, %v535, %v534
        %v537 = vperm.slane %v428, %v499
        %v538 = vsel %vm501, %v537, %v536
        %v539 = vperm.slane %v429, %v503
        %v540 = vsel %vm505, %v539, %v538
        %v541 = vperm.slane %v430, %v507
        %v542 = vsel %vm509, %v541, %v540
        %v543 = vperm.slane %v431, %v511
        %v544 = vsel %vm513, %v543, %v542
        %v545 = vperm.slane %v432, %v485
        %v546 = vperm.slane %v433, %v487
        %v547 = vsel %vm489, %v546, %v545
        %v548 = vperm.slane %v434, %v491
        %v549 = vsel %vm493, %v548, %v547
        %v550 = vperm.slane %v435, %v495
        %v551 = vsel %vm497, %v550, %v549
        %v552 = vperm.slane %v436, %v499
        %v553 = vsel %vm501, %v552, %v551
        %v554 = vperm.slane %v437, %v503
        %v555 = vsel %vm505, %v554, %v553
        %v556 = vperm.slane %v438, %v507
        %v557 = vsel %vm509, %v556, %v555
        %v558 = vperm.slane %v439, %v511
        %v559 = vsel %vm513, %v558, %v557
        %vm560 = vcmask 1041409
        %v561 = vsel %vm560, %v529, %v514
        %vm562 = vcmask 1042434
        %v563 = vsel %vm562, %v544, %v561
        %vm564 = vcmask 1043459
        %v565 = vsel %vm564, %v559, %v563
        %vm566 = vcmask 523264
        %v567 = vsel %vm566, %v565, 0
        %569 = vmatpush.msra.mxu0 0.0
        %570 = vmatpush.msra.mxu0 0.0
        %571 = vmatpush.msra.mxu0 0.0
        %572 = vmatpush.msra.mxu0 0.0
        %573 = vmatpush.msra.mxu0 0.0
        %574 = vmatpush.msra.mxu0 0.0
        %575 = vmatpush.msra.mxu0 0.0
        %576 = vmatpush.msra.mxu0 0.0
        %577 = vmatpush.msra.mxu0 %v447
        %578 = vmatpush.msra.mxu0 %v446
        %579 = vmatpush.msra.mxu0 %v445
        %580 = vmatpush.msra.mxu0 %v444
        %581 = vmatpush.msra.mxu0 %v443
        %582 = vmatpush.msra.mxu0 %v442
        %583 = vmatpush.msra.mxu0 %v441
        %584 = vmatpush.msra.mxu0 %v440
        %585 = vmatmul.f32.gmra.mxu0 %v567
        %v586 = vpop.f32.mrf.mxu0
        %v587 = vadd.f32 %v450, %v586
        %588 = vdwg.mxu0
        %v589 = vmax.f32 %v587, 0.0
        %v590 = vld [vmem:[%s3] sm:$0xff]
        %v591 = vld [vmem:[%s3 + $0x8] sm:$0xff]
        %v592 = vld [vmem:[%s3 + $0x10] sm:$0xff]
        %v593 = vld [vmem:[%s3 + $0x18] sm:$0xff]
        %v594 = vld [vmem:[%s4] sm:$0x1]
        %v596 = vperm.slane %v594, 0
        %vm598 = vcmask 261120
        %v600 = vsel %vm598, %v589, 0
        %602 = vmatpush.msra.mxu0 0.0
        %603 = vmatpush.msra.mxu0 0.0
        %604 = vmatpush.msra.mxu0 0.0
        %605 = vmatpush.msra.mxu0 0.0
        %606 = vmatpush.msra.mxu0 0.0
        %607 = vmatpush.msra.mxu0 0.0
        %608 = vmatpush.msra.mxu0 0.0
        %609 = vmatpush.msra.mxu0 0.0
        %610 = vmatpush.msra.mxu0 0.0
        %611 = vmatpush.msra.mxu0 0.0
        %612 = vmatpush.msra.mxu0 0.0
        %613 = vmatpush.msra.mxu0 0.0
        %614 = vmatpush.msra.mxu0 %v593
        %615 = vmatpush.msra.mxu0 %v592
        %616 = vmatpush.msra.mxu0 %v591
        %617 = vmatpush.msra.mxu0 %v590
        %618 = vmatmul.f32.gmra.mxu0 %v600
        %v619 = vpop.f32.mrf.mxu0
        %v620 = vadd.f32 %v596, %v619
        %621 = vdwg.mxu0
        %v622 = vxor.u32 %v620, 2147483648
        %v623 = vmul.f32 %v622, 1.442695
        %v624 = vpow.pop %v623
        %v625 = vadd.f32 %v624, 1.0
        %v626 = vrcp.pop %v625
        %v627 = vmul.f32 %v625, %v626
        %v628 = vsub.f32 1.0, %v627
        %v629 = vmul.f32 %v626, %v628
        %v630 = vadd.f32 %v626, %v629
        %vm631 = vweird.f32 %v625
        %vm632 = vweird.f32 %v626
        %vm633 = vmor %vm631, %vm632
        %v634 = vsel %vm633, %v626, %v630
        %v635 = vand.u32 2147483647, %v625
        %vm636 = vcmp.eq.f32.partialorder %v635, 8.507059e+37
        %v637 = vand.u32 %v625, 2147483648
        %v638 = vor.u32 1.1754944e-38, %v637
        %v639 = vsel %vm636, %v638, %v634
        %v640 = vmul.f32 1.0, %v639
        %v641 = vperm.slane %v640, 0
        %v642 = vlaneseq
        %v643 = vshrl.u32 %v642, 7
        %645 = vset.pattern.permute.xlu0 %v643
        %646 = vperm.xlu0 %645, %v641
        %v647 = vpop.permute.xlu0 %646
        %v648 = vlaneseq
        %v649 = vshrl.u32 %v648, 7
        %v650 = vadd.s32 %v649, 8
        %651 = vset.pattern.permute.xlu0 %v650
        %652 = vperm.xlu0 %651, %v641
        %v653 = vpop.permute.xlu0 %652
        %v654 = vlaneseq
        %v655 = vshrl.u32 %v654, 7
        %v656 = vadd.s32 %v655, 16
        %657 = vset.pattern.permute.xlu0 %v656
        %658 = vperm.xlu0 %657, %v641
        %v659 = vpop.permute.xlu0 %658
        %v660 = vlaneseq
        %v661 = vshrl.u32 %v660, 7
        %v662 = vadd.s32 %v661, 24
        %663 = vset.pattern.permute.xlu0 %v662
        %664 = vperm.xlu0 %663, %v641
        %v665 = vpop.permute.xlu0 %664
        %v666 = vlaneseq
        %v667 = vshrl.u32 %v666, 7
        %v668 = vadd.s32 %v667, 32
        %669 = vset.pattern.permute.xlu0 %v668
        %670 = vperm.xlu0 %669, %v641
        %v671 = vpop.permute.xlu0 %670
        %v672 = vlaneseq
        %v673 = vshrl.u32 %v672, 7
        %v674 = vadd.s32 %v673, 40
        %675 = vset.pattern.permute.xlu0 %v674
        %676 = vperm.xlu0 %675, %v641
        %v677 = vpop.permute.xlu0 %676
        %v678 = vlaneseq
        %v679 = vshrl.u32 %v678, 7
        %v680 = vadd.s32 %v679, 48
        %681 = vset.pattern.permute.xlu0 %v680
        %682 = vperm.xlu0 %681, %v641
        %v683 = vpop.permute.xlu0 %682
        %v684 = vlaneseq
        %v685 = vshrl.u32 %v684, 7
        %v686 = vadd.s32 %v685, 56
        %687 = vset.pattern.permute.xlu0 %v686
        %688 = vperm.xlu0 %687, %v641
        %v689 = vpop.permute.xlu0 %688
        %v690 = vperm.slane %v640, 1
        %v691 = vlaneseq
        %v692 = vshrl.u32 %v691, 7
        %694 = vset.pattern.permute.xlu0 %v692
        %695 = vperm.xlu0 %694, %v690
        %v696 = vpop.permute.xlu0 %695
        %v697 = vlaneseq
        %v698 = vshrl.u32 %v697, 7
        %v699 = vadd.s32 %v698, 8
        %700 = vset.pattern.permute.xlu0 %v699
        %701 = vperm.xlu0 %700, %v690
        %v702 = vpop.permute.xlu0 %701
        %v703 = vlaneseq
        %v704 = vshrl.u32 %v703, 7
        %v705 = vadd.s32 %v704, 16
        %706 = vset.pattern.permute.xlu0 %v705
        %707 = vperm.xlu0 %706, %v690
        %v708 = vpop.permute.xlu0 %707
        %v709 = vlaneseq
        %v710 = vshrl.u32 %v709, 7
        %v711 = vadd.s32 %v710, 24
        %712 = vset.pattern.permute.xlu0 %v711
        %713 = vperm.xlu0 %712, %v690
        %v714 = vpop.permute.xlu0 %713
        %v715 = vlaneseq
        %v716 = vshrl.u32 %v715, 7
        %v717 = vadd.s32 %v716, 32
        %718 = vset.pattern.permute.xlu0 %v717
        %719 = vperm.xlu0 %718, %v690
        %v720 = vpop.permute.xlu0 %719
        %v721 = vlaneseq
        %v722 = vshrl.u32 %v721, 7
        %v723 = vadd.s32 %v722, 40
        %724 = vset.pattern.permute.xlu0 %v723
        %725 = vperm.xlu0 %724, %v690
        %v726 = vpop.permute.xlu0 %725
        %v727 = vlaneseq
        %v728 = vshrl.u32 %v727, 7
        %v729 = vadd.s32 %v728, 48
        %730 = vset.pattern.permute.xlu0 %v729
        %731 = vperm.xlu0 %730, %v690
        %v732 = vpop.permute.xlu0 %731
        %v733 = vlaneseq
        %v734 = vshrl.u32 %v733, 7
        %v735 = vadd.s32 %v734, 56
        %736 = vset.pattern.permute.xlu0 %v735
        %737 = vperm.xlu0 %736, %v690
        %v738 = vpop.permute.xlu0 %737
        %v739 = vperm.slane %v640, 2
        %v740 = vlaneseq
        %v741 = vshrl.u32 %v740, 7
        %743 = vset.pattern.permute.xlu0 %v741
        %744 = vperm.xlu0 %743, %v739
        %v745 = vpop.permute.xlu0 %744
        %v746 = vlaneseq
        %v747 = vshrl.u32 %v746, 7
        %v748 = vadd.s32 %v747, 8
        %749 = vset.pattern.permute.xlu0 %v748
        %750 = vperm.xlu0 %749, %v739
        %v751 = vpop.permute.xlu0 %750
        %v752 = vlaneseq
        %v753 = vshrl.u32 %v752, 7
        %v754 = vadd.s32 %v753, 16
        %755 = vset.pattern.permute.xlu0 %v754
        %756 = vperm.xlu0 %755, %v739
        %v757 = vpop.permute.xlu0 %756
        %v758 = vlaneseq
        %v759 = vshrl.u32 %v758, 7
        %v760 = vadd.s32 %v759, 24
        %761 = vset.pattern.permute.xlu0 %v760
        %762 = vperm.xlu0 %761, %v739
        %v763 = vpop.permute.xlu0 %762
        %v764 = vlaneseq
        %v765 = vshrl.u32 %v764, 7
        %v766 = vadd.s32 %v765, 32
        %767 = vset.pattern.permute.xlu0 %v766
        %768 = vperm.xlu0 %767, %v739
        %v769 = vpop.permute.xlu0 %768
        %v770 = vlaneseq
        %v771 = vshrl.u32 %v770, 7
        %v772 = vadd.s32 %v771, 40
        %773 = vset.pattern.permute.xlu0 %v772
        %774 = vperm.xlu0 %773, %v739
        %v775 = vpop.permute.xlu0 %774
        %v776 = vlaneseq
        %v777 = vshrl.u32 %v776, 7
        %v778 = vadd.s32 %v777, 48
        %779 = vset.pattern.permute.xlu0 %v778
        %780 = vperm.xlu0 %779, %v739
        %v781 = vpop.permute.xlu0 %780
        %v782 = vlaneseq
        %v783 = vshrl.u32 %v782, 7
        %v784 = vadd.s32 %v783, 56
        %785 = vset.pattern.permute.xlu0 %v784
        %786 = vperm.xlu0 %785, %v739
        %v787 = vpop.permute.xlu0 %786
        %v788 = vperm.slane %v640, 3
        %v789 = vlaneseq
        %v790 = vshrl.u32 %v789, 7
        %792 = vset.pattern.permute.xlu0 %v790
        %793 = vperm.xlu0 %792, %v788
        %v794 = vpop.permute.xlu0 %793
        %v795 = vlaneseq
        %v796 = vshrl.u32 %v795, 7
        %v797 = vadd.s32 %v796, 8
        %798 = vset.pattern.permute.xlu0 %v797
        %799 = vperm.xlu0 %798, %v788
        %v800 = vpop.permute.xlu0 %799
        %v801 = vlaneseq
        %v802 = vshrl.u32 %v801, 7
        %v803 = vadd.s32 %v802, 16
        %804 = vset.pattern.permute.xlu0 %v803
        %805 = vperm.xlu0 %804, %v788
        %v806 = vpop.permute.xlu0 %805
        %v807 = vlaneseq
        %v808 = vshrl.u32 %v807, 7
        %v809 = vadd.s32 %v808, 24
        %810 = vset.pattern.permute.xlu0 %v809
        %811 = vperm.xlu0 %810, %v788
        %v812 = vpop.permute.xlu0 %811
        %v813 = vlaneseq
        %v814 = vshrl.u32 %v813, 7
        %v815 = vadd.s32 %v814, 32
        %816 = vset.pattern.permute.xlu0 %v815
        %817 = vperm.xlu0 %816, %v788
        %v818 = vpop.permute.xlu0 %817
        %v819 = vlaneseq
        %v820 = vshrl.u32 %v819, 7
        %v821 = vadd.s32 %v820, 40
        %822 = vset.pattern.permute.xlu0 %v821
        %823 = vperm.xlu0 %822, %v788
        %v824 = vpop.permute.xlu0 %823
        %v825 = vlaneseq
        %v826 = vshrl.u32 %v825, 7
        %v827 = vadd.s32 %v826, 48
        %828 = vset.pattern.permute.xlu0 %v827
        %829 = vperm.xlu0 %828, %v788
        %v830 = vpop.permute.xlu0 %829
        %v831 = vlaneseq
        %v832 = vshrl.u32 %v831, 7
        %v833 = vadd.s32 %v832, 56
        %834 = vset.pattern.permute.xlu0 %v833
        %835 = vperm.xlu0 %834, %v788
        %v836 = vpop.permute.xlu0 %835
        %v837 = vmul.f32 %v248, %v647
        %v838 = vmul.f32 %v249, %v647
        %v839 = vmul.f32 %v250, %v653
        %v840 = vmul.f32 %v251, %v653
        %v841 = vmul.f32 %v252, %v659
        %v842 = vmul.f32 %v253, %v659
        %v843 = vmul.f32 %v254, %v665
        %v844 = vmul.f32 %v255, %v665
        %v845 = vmul.f32 %v256, %v671
        %v846 = vmul.f32 %v257, %v671
        %v847 = vmul.f32 %v258, %v677
        %v848 = vmul.f32 %v259, %v677
        %v849 = vmul.f32 %v260, %v683
        %v850 = vmul.f32 %v261, %v683
        %v851 = vmul.f32 %v262, %v689
        %v852 = vmul.f32 %v263, %v689
        %v853 = vmul.f32 %v264, %v696
        %v854 = vmul.f32 %v265, %v696
        %v855 = vmul.f32 %v266, %v702
        %v856 = vmul.f32 %v267, %v702
        %v857 = vmul.f32 %v268, %v708
        %v858 = vmul.f32 %v269, %v708
        %v859 = vmul.f32 %v270, %v714
        %v860 = vmul.f32 %v271, %v714
        %v861 = vmul.f32 %v272, %v720
        %v862 = vmul.f32 %v273, %v720
        %v863 = vmul.f32 %v274, %v726
        %v864 = vmul.f32 %v275, %v726
        %v865 = vmul.f32 %v276, %v732
        %v866 = vmul.f32 %v277, %v732
        %v867 = vmul.f32 %v278, %v738
        %v868 = vmul.f32 %v279, %v738
        %v869 = vmul.f32 %v280, %v745
        %v870 = vmul.f32 %v281, %v745
        %v871 = vmul.f32 %v282, %v751
        %v872 = vmul.f32 %v283, %v751
        %v873 = vmul.f32 %v284, %v757
        %v874 = vmul.f32 %v285, %v757
        %v875 = vmul.f32 %v286, %v763
        %v876 = vmul.f32 %v287, %v763
        %v877 = vmul.f32 %v288, %v769
        %v878 = vmul.f32 %v289, %v769
        %v879 = vmul.f32 %v290, %v775
        %v880 = vmul.f32 %v291, %v775
        %v881 = vmul.f32 %v292, %v781
        %v882 = vmul.f32 %v293, %v781
        %v883 = vmul.f32 %v294, %v787
        %v884 = vmul.f32 %v295, %v787
        %v885 = vmul.f32 %v296, %v794
        %v886 = vmul.f32 %v297, %v794
        %v887 = vmul.f32 %v298, %v800
        %v888 = vmul.f32 %v299, %v800
        %v889 = vmul.f32 %v300, %v806
        %v890 = vmul.f32 %v301, %v806
        %v891 = vmul.f32 %v302, %v812
        %v892 = vmul.f32 %v303, %v812
        %v893 = vmul.f32 %v304, %v818
        %v894 = vmul.f32 %v305, %v818
        %v895 = vmul.f32 %v306, %v824
        %v896 = vmul.f32 %v307, %v824
        %v897 = vmul.f32 %v308, %v830
        %v898 = vmul.f32 %v309, %v830
        %v899 = vmul.f32 %v310, %v836
        %v900 = vmul.f32 %v311, %v836
        %901 = vst [vmem:[%s245] sm:$0xff] %v837
        %902 = vst [vmem:[%s245 + $0x8] sm:$0xff] %v838
        %903 = vst [vmem:[%s245 + $0x10] sm:$0xff] %v839
        %904 = vst [vmem:[%s245 + $0x18] sm:$0xff] %v840
        %905 = vst [vmem:[%s245 + $0x20] sm:$0xff] %v841
        %906 = vst [vmem:[%s245 + $0x28] sm:$0xff] %v842
        %907 = vst [vmem:[%s245 + $0x30] sm:$0xff] %v843
        %908 = vst [vmem:[%s245 + $0x38] sm:$0xff] %v844
        %909 = vst [vmem:[%s245 + $0x40] sm:$0xff] %v845
        %910 = vst [vmem:[%s245 + $0x48] sm:$0xff] %v846
        %911 = vst [vmem:[%s245 + $0x50] sm:$0xff] %v847
        %912 = vst [vmem:[%s245 + $0x58] sm:$0xff] %v848
        %913 = vst [vmem:[%s245 + $0x60] sm:$0xff] %v849
        %914 = vst [vmem:[%s245 + $0x68] sm:$0xff] %v850
        %915 = vst [vmem:[%s245 + $0x70] sm:$0xff] %v851
        %916 = vst [vmem:[%s245 + $0x78] sm:$0xff] %v852
        %917 = vst [vmem:[%s245 + $0x80] sm:$0xff] %v853
        %918 = vst [vmem:[%s245 + $0x88] sm:$0xff] %v854
        %919 = vst [vmem:[%s245 + $0x90] sm:$0xff] %v855
        %920 = vst [vmem:[%s245 + $0x98] sm:$0xff] %v856
        %921 = vst [vmem:[%s245 + $0xa0] sm:$0xff] %v857
        %922 = vst [vmem:[%s245 + $0xa8] sm:$0xff] %v858
        %923 = vst [vmem:[%s245 + $0xb0] sm:$0xff] %v859
        %924 = vst [vmem:[%s245 + $0xb8] sm:$0xff] %v860
        %925 = vst [vmem:[%s245 + $0xc0] sm:$0xff] %v861
        %926 = vst [vmem:[%s245 + $0xc8] sm:$0xff] %v862
        %927 = vst [vmem:[%s245 + $0xd0] sm:$0xff] %v863
        %928 = vst [vmem:[%s245 + $0xd8] sm:$0xff] %v864
        %929 = vst [vmem:[%s245 + $0xe0] sm:$0xff] %v865
        %930 = vst [vmem:[%s245 + $0xe8] sm:$0xff] %v866
        %931 = vst [vmem:[%s245 + $0xf0] sm:$0xff] %v867
        %932 = vst [vmem:[%s245 + $0xf8] sm:$0xff] %v868
        %933 = vst [vmem:[%s245 + $0x100] sm:$0xff] %v869
        %934 = vst [vmem:[%s245 + $0x108] sm:$0xff] %v870
        %935 = vst [vmem:[%s245 + $0x110] sm:$0xff] %v871
        %936 = vst [vmem:[%s245 + $0x118] sm:$0xff] %v872
        %937 = vst [vmem:[%s245 + $0x120] sm:$0xff] %v873
        %938 = vst [vmem:[%s245 + $0x128] sm:$0xff] %v874
        %939 = vst [vmem:[%s245 + $0x130] sm:$0xff] %v875
        %940 = vst [vmem:[%s245 + $0x138] sm:$0xff] %v876
        %941 = vst [vmem:[%s245 + $0x140] sm:$0xff] %v877
        %942 = vst [vmem:[%s245 + $0x148] sm:$0xff] %v878
        %943 = vst [vmem:[%s245 + $0x150] sm:$0xff] %v879
        %944 = vst [vmem:[%s245 + $0x158] sm:$0xff] %v880
        %945 = vst [vmem:[%s245 + $0x160] sm:$0xff] %v881
        %946 = vst [vmem:[%s245 + $0x168] sm:$0xff] %v882
        %947 = vst [vmem:[%s245 + $0x170] sm:$0xff] %v883
        %948 = vst [vmem:[%s245 + $0x178] sm:$0xff] %v884
        %949 = vst [vmem:[%s245 + $0x180] sm:$0xff] %v885
        %950 = vst [vmem:[%s245 + $0x188] sm:$0xff] %v886
        %951 = vst [vmem:[%s245 + $0x190] sm:$0xff] %v887
        %952 = vst [vmem:[%s245 + $0x198] sm:$0xff] %v888
        %953 = vst [vmem:[%s245 + $0x1a0] sm:$0xff] %v889
        %954 = vst [vmem:[%s245 + $0x1a8] sm:$0xff] %v890
        %955 = vst [vmem:[%s245 + $0x1b0] sm:$0xff] %v891
        %956 = vst [vmem:[%s245 + $0x1b8] sm:$0xff] %v892
        %957 = vst [vmem:[%s245 + $0x1c0] sm:$0xff] %v893
        %958 = vst [vmem:[%s245 + $0x1c8] sm:$0xff] %v894
        %959 = vst [vmem:[%s245 + $0x1d0] sm:$0xff] %v895
        %960 = vst [vmem:[%s245 + $0x1d8] sm:$0xff] %v896
        %961 = vst [vmem:[%s245 + $0x1e0] sm:$0xff] %v897
        %962 = vst [vmem:[%s245 + $0x1e8] sm:$0xff] %v898
        %963 = vst [vmem:[%s245 + $0x1f0] sm:$0xff] %v899
        %964 = vst [vmem:[%s245 + $0x1f8] sm:$0xff] %v900
        %s965 = sand.u32 %s140, 1
        %s966 = scalar_lea.sflag [#allocation4], %s965
        %s967 = sand.u32 %s140, 1
        %s968 = smul.addr %s967, 512
        %s969 = scalar_lea.vmem [#allocation5], %s968
        // Predicated region
        $region45: #{tpu_custom_call.1} parent=39 // pred_check
          %p970 = pneg %p150
        $region46: #{tpu_custom_call.1} parent=39 // pred_check_branch
          %972 = sbr.rel (%p970) target = $region48
        $region47: #{tpu_custom_call.1} parent=39 // pred_region
          %s973 = smul.u32 4, %s22
          %975 = vsyncadd %s966, 0
          %s976 = smul.addr %s973, 16
          %s977 = smul.addr %s976, 8
          %s978 = scalar_lea.hbm %s5, %s977
          %s979 = sshll.u32 %s969, 4
          %s980 = int_to_ptr.vmem [resolvable:$true] %s979
          %s981 = sshll.u32 %s978, 4
          %s982 = int_to_ptr.hbm [resolvable:$true] %s981
          %987 = dma.vmem_to_hbm [thread:$0]  %s980, 8192, %s982, %s966, 256, 256, 16
        $region48: #{tpu_custom_call.1} parent=39 // pred_fallthru
          _
      $region40: #{tpu_custom_call.1} parent=5 // pred_fallthru
        _
      %p988 = scmp.le.s32.totalorder 2, %s17
      // Predicated region
      $region49: #{tpu_custom_call.1} parent=5 // pred_check
        %p989 = pneg %p988
      $region50: #{tpu_custom_call.1} parent=5 // pred_check_branch
        %991 = sbr.rel (%p989) target = $region52
      $region51: #{tpu_custom_call.1} parent=5 // pred_region
        %s992 = ssub.s32 %s17, 2
        // Predicated region
        $region53: #{tpu_custom_call.1} parent=51 // pred_check
          %p993 = pneg %p156
        $region54: #{tpu_custom_call.1} parent=51 // pred_check_branch
          %995 = sbr.rel (%p993) target = $region56
        $region55: #{tpu_custom_call.1} parent=51 // pred_region
          %s996 = sand.u32 %s141, 1
          %s997 = scalar_lea.sflag [#allocation4], %s996
          %s998 = sand.u32 %s141, 1
          %s999 = smul.addr %s998, 512
          %s1000 = scalar_lea.vmem [#allocation5], %s999
          %1002 = dma.done %s997, 8192
        $region56: #{tpu_custom_call.1} parent=51 // pred_fallthru
          _
      $region52: #{tpu_custom_call.1} parent=5 // pred_fallthru
        _
    $region6: #{tpu_custom_call.1} parent=1 // loop_footer
      %s21 = sadd.s32 1, %s17
    $region7: #{tpu_custom_call.1} parent=1 // loop_footer_branch
      %16 = sbr.rel target = $region3
    $region8: #{tpu_custom_call.1} parent=1 // loop_exit
      _
    %1003 = vsyncpa [#allocation3], 1
    %s1004 = scalar_lea.sflag [#allocation3], 1
    %1005 = vsyncpa %s1004, 1
    %1006 = vsyncpa [#allocation4], 1
    %s1007 = scalar_lea.sflag [#allocation4], 1
    %1008 = vsyncpa %s1007, 1

</llo_original>
